<compile_context>
chip_gen: v6e
topology: v6e:2x2x1
jax: 0.10.0
libtpu: 0.0.40
codegen_flags: <defaults>
</compile_context>

<pallas_src>
import numpy as np
import jax
import jax.numpy as jnp
from jax.experimental import pallas as pl
from jax.experimental.pallas import tpu as pltpu


# -----------------------------------------------------------------------------
# Kernel: elementwise numerically-stable softplus on a 2-D f32 tile.
#   softplus(x) = max(x, 0) + log1p(exp(-|x|))
# (Matches PyTorch's threshold-20 softplus to f32 precision; for x > 20 the
#  log1p term is < 2e-9 and vanishes in f32.)
# -----------------------------------------------------------------------------
def _softplus_kernel(x_ref, o_ref):
    x = x_ref[...]
    o_ref[...] = jnp.maximum(x, 0.0) + jnp.log1p(jnp.exp(-jnp.abs(x)))


def _softplus_pallas_raw(x2d: jax.Array) -> jax.Array:
    """Single pallas_call over a full 2-D f32 array (no grid, full-array specs)."""
    return pl.pallas_call(
        _softplus_kernel,
        out_shape=jax.ShapeDtypeStruct(x2d.shape, jnp.float32),
        in_specs=[pl.BlockSpec(memory_space=pltpu.MemorySpace.VMEM)],
        out_specs=pl.BlockSpec(memory_space=pltpu.MemorySpace.VMEM),
    )(x2d)


# -----------------------------------------------------------------------------
# Differentiable wrapper (pallas_call has no default VJP; log_nu is trainable).
# Backward stays plain jnp (fused sigmoid-mul) — no second custom call.
# -----------------------------------------------------------------------------
@jax.custom_vjp
def _softplus_pallas(x2d: jax.Array) -> jax.Array:
    return _softplus_pallas_raw(x2d)


def _softplus_pallas_fwd(x2d):
    return _softplus_pallas_raw(x2d), x2d


def _softplus_pallas_bwd(x2d, g):
    return (g * jax.nn.sigmoid(x2d),)   # d/dx softplus(x) = sigmoid(x)


_softplus_pallas.defvjp(_softplus_pallas_fwd, _softplus_pallas_bwd)


# -----------------------------------------------------------------------------
# Public API
# -----------------------------------------------------------------------------
def nu_forward(log_nu: jax.Array) -> jax.Array:
    """Nu.forward() via the Pallas kernel: softplus(log_nu) -> shape (1,).

    `log_nu` should be stored in the canonical (1, 1) float32 layout (see
    `init_nu_params`); asarray/reshape are then identity ops XLA folds away.
    """
    x2d = jnp.asarray(log_nu, jnp.float32).reshape(1, 1)
    return _softplus_pallas(x2d).reshape(1)


def nu_forward_inline(log_nu: jax.Array) -> jax.Array:
    """Recommended production path: plain softplus, fused by XLA into whatever
    consumes nu, differentiable for free (no custom-call fusion barrier)."""
    return jax.nn.softplus(jnp.asarray(log_nu, jnp.float32)).reshape(1)


def nu_forward_batched(log_nu_tile: jax.Array) -> jax.Array:
    """One softplus over an (8, 128)-padded f32 tile of many scalar multipliers.

    Amortizes the fixed pallas_call overhead across all multipliers and makes
    the output store an unmasked, lane-dense vst. Returns a tile of the same
    shape; callers slice out the entries they own.
    """
    return _softplus_pallas(jnp.asarray(log_nu_tile, jnp.float32))


def init_nu_params(penalty_init: float = 1.0) -> jax.Array:
    """Deterministic parameter init matching Nu.__init__ (canonical (1,1) f32)."""
    log_val = np.log(max(np.exp(penalty_init) - 1.0, 1e-08))
    return jnp.full((1, 1), log_val, dtype=jnp.float32)


def init_nu_params_batched(penalty_inits) -> jax.Array:
    """Pack N multipliers' init values into row 0 of an (8, 128) f32 tile."""
    vals = np.asarray(penalty_inits, dtype=np.float64)
    assert vals.size <= 128, "batched tile holds up to 128 multipliers per row"
    log_vals = np.log(np.maximum(np.exp(vals) - 1.0, 1e-08)).astype(np.float32)
    tile = np.zeros((8, 128), dtype=np.float32)
    tile[0, : vals.size] = log_vals
    return jnp.asarray(tile)


def clamp_log_nu(log_nu: jax.Array, penalty_init: float = 1.0,
                 max_clamp: float = float("inf")) -> jax.Array:
    """Functional analogue of Nu.clamp(): project log_nu into its valid range.

    Matches the PyTorch reference: min = log(max(exp(penalty_init), 1e-8))
    (== penalty_init), max = max_clamp. Optimizer-side projection; plain jnp.
    """
    # TODO(synk): in-place .data.clamp_ has no Pallas equivalent; apply this
    # functionally in the optimizer update step.
    min_val = np.log(max(np.exp(penalty_init), 1e-08))
    return jnp.clip(jnp.asarray(log_nu, jnp.float32), min_val, max_clamp)


# -----------------------------------------------------------------------------
# Self-test
# -----------------------------------------------------------------------------
if __name__ == "__main__":
    key = jax.random.PRNGKey(0)

    penalty_init = 1.0
    log_nu = init_nu_params(penalty_init)            # (1, 1) float32, canonical layout

    # --- single-multiplier forward (Pallas path) --------------------------------
    nu_fn = jax.jit(nu_forward)
    nu = nu_fn(log_nu)
    jax.block_until_ready(nu)

    ref = nu_forward_inline(log_nu)
    assert nu.shape == (1,)
    assert nu.dtype == jnp.float32
    np.testing.assert_allclose(np.asarray(nu), np.asarray(ref), rtol=1e-6, atol=1e-6)
    # Analytic identity: softplus(log(exp(p) - 1)) == p.
    np.testing.assert_allclose(np.asarray(nu), np.array([penalty_init], np.float32),
                               rtol=1e-5, atol=1e-5)

    # --- gradient through the trainable parameter (custom_vjp) ------------------
    g = jax.grad(lambda p: nu_forward(p)[0])(log_nu)
    jax.block_until_ready(g)
    np.testing.assert_allclose(np.asarray(g), np.asarray(jax.nn.sigmoid(log_nu)),
                               rtol=1e-6, atol=1e-6)

    # --- batched (8, 128) tile of multipliers: one kernel for all of them -------
    tile_init = init_nu_params_batched([1.0, 0.5, 2.0, 0.1])
    noise = 0.05 * jax.random.normal(key, (8, 128), dtype=jnp.float32)
    tile = tile_init + noise                         # deterministic example input
    nu_tile = jax.jit(nu_forward_batched)(tile)
    jax.block_until_ready(nu_tile)
    np.testing.assert_allclose(np.asarray(nu_tile),
                               np.asarray(jax.nn.softplus(tile)),
                               rtol=1e-6, atol=1e-6)

    # --- clamp helper matches the PyTorch clamp floor (== penalty_init) ---------
    clamped = clamp_log_nu(log_nu - 10.0, penalty_init)
    np.testing.assert_allclose(np.asarray(clamped),
                               np.full((1, 1), penalty_init, np.float32),
                               rtol=1e-6, atol=1e-6)

    print("KERNEL_OK")
</pallas_src>

<mosaic_0001>
module attributes {stable_mosaic.version = 11 : i64} {
  func.func @_softplus_kernel(%arg0: memref<1x1xf32, #tpu.memory_space<vmem>>, %arg1: memref<1x1xf32, #tpu.memory_space<vmem>>) attributes {dimension_semantics = [], scalar_prefetch = 0 : i64, scratch_operands = 0 : i64, tpu.core_type = #tpu.core_type<tc>} {
    %c0 = arith.constant 0 : index
    %c0_0 = arith.constant 0 : index
    %0 = vector.load %arg0[%c0, %c0_0] : memref<1x1xf32, #tpu.memory_space<vmem>>, vector<1x1xf32>
    %cst = arith.constant 0.000000e+00 : f32
    %1 = vector.broadcast %cst : f32 to vector<1x1xf32>
    %2 = arith.maximumf %0, %1 : vector<1x1xf32>
    %3 = math.absf %0 : vector<1x1xf32>
    %cst_1 = arith.constant 0.000000e+00 : f32
    %4 = vector.broadcast %cst_1 : f32 to vector<1x1xf32>
    %5 = arith.subf %4, %3 : vector<1x1xf32>
    %6 = math.exp %5 : vector<1x1xf32>
    %7 = math.log1p %6 : vector<1x1xf32>
    %8 = arith.addf %2, %7 : vector<1x1xf32>
    %c0_2 = arith.constant 0 : index
    %c0_3 = arith.constant 0 : index
    %9 = vector.load %arg1[%c0_2, %c0_3] : memref<1x1xf32, #tpu.memory_space<vmem>>, vector<1x1xf32>
    tpu.vector_store %arg1[%c0_2, %c0_3], %8 {strides = array<i32>} : memref<1x1xf32, #tpu.memory_space<vmem>>, vector<1x1xf32>,
    return
  }
}

</mosaic_0001>

<llo_original>
// kernel: nu_forward.1
$region0: #{nu_forward.1}
  #allocation0 [shape = 'u32[]', space=smem, size = 0x4, offset = 0x4, fixed_abs, tag = 'smem constant byte address 0x4 - core index']
  #allocation1 [shape = 'u32[144,128]{1,0:T(1,128)}', space=vmem, size = 0x12000, scoped, tag = 'internal scratch']
  #allocation2 [shape = 'f32[1,1]{1,0:T(1,128)S(1)}', space=vmem, size = 0x200, scoped, tag = 'scoped memory for nu_forward.1']
  %s0 = inlined_call_operand.<no memory space> [shape: f32[1,1], index: 0, kind: input, shape index: {}]
  %s1 = inlined_call_operand.hbm [shape: f32[1,1], index: 1, kind: output, shape index: {}]
  %s2 = sld [smem:[#allocation0]]
  $region14: #{nu_forward.1} parent=0
    _
  %s4 = ssub.s32 1, %s2
  %s5 = scalar_select 0, %s4, %s2
  %v6 = vstv %s0
  %7 = vst [vmem:[#allocation2] sm:$0x1] %v6
  $region1: #{nu_forward.1} parent=0
    #allocation3 [shape = 'u8[512]{0}', space=vmem, size = 0x400, scoped, tag = 'output window, operand 0, single buffered']
    #allocation4 [shape = 's32[1]{0}', space=sflag, size = 0x4, scoped, tag = 'scoped memory for nu_forward.1']
    %8 = vsyncpa [#allocation4], 0
    // Predicated region
    $region2: #{nu_forward.1} parent=1 // pred_check
      _
    $region3: #{nu_forward.1} parent=1 // pred_check_branch
      %10 = sbr.rel (0) target = $region5
    $region4: #{nu_forward.1} parent=1 // pred_region
      _
    $region5: #{nu_forward.1} parent=1 // pred_fallthru
      _
    %v11 = vld [vmem:[#allocation2] sm:$0x1]
    %v12 = vmax.f32 %v11, 0.0
    %v13 = vand.u32 2147483647, %v11
    %v14 = vsub.f32 0.0, %v13
    %v15 = vmul.f32 %v14, 1.442695
    %v16 = vpow.pop %v15
    %v17 = vadd.f32 %v16, 1.0
    %v18 = vlog2.pop %v17
    %v19 = vmul.f32 %v18, 0.6931472
    %v20 = vmul.f32 -0.5, %v16
    %v21 = vadd.f32 %v20, 1.0
    %v22 = vmul.f32 %v21, %v16
    %v23 = vand.u32 2147483647, %v16
    %vm24 = vcmp.lt.f32.partialorder %v23, 0.0004427343
    %v25 = vsel %vm24, %v22, %v19
    %v26 = vadd.f32 %v12, %v25
    %vm27 = vcmask 0
    %28 = vst.msk [vmem:[#allocation3] sm:$0x1] %vm27, %v26
    // Predicated region
    $region6: #{nu_forward.1} parent=1 // pred_check
      _
    $region7: #{nu_forward.1} parent=1 // pred_check_branch
      %30 = sbr.rel (0) target = $region9
    $region8: #{nu_forward.1} parent=1 // pred_region
      %s32 = ssub.s32 16, 16
      %33 = vsyncadd [#allocation4], %s32
      %s35 = sshll.u32 [#allocation3], 4
      %s36 = int_to_ptr.vmem [resolvable:$true] %s35
      %38 = dma.vmem_to_hbm [thread:$0]  %s36, 16, %s1, [#allocation4]
    $region9: #{nu_forward.1} parent=1 // pred_fallthru
      _
    // Predicated region
    $region10: #{nu_forward.1} parent=1 // pred_check
      _
    $region11: #{nu_forward.1} parent=1 // pred_check_branch
      %40 = sbr.rel (0) target = $region13
    $region12: #{nu_forward.1} parent=1 // pred_region
      %41 = dma.done [#allocation4], 16
    $region13: #{nu_forward.1} parent=1 // pred_fallthru
      _
    %42 = vsyncpa [#allocation4], 1

</llo_original>
